<compile_context>
chip_gen: v5e
topology: v5e:2x2
jax: 0.10.0
libtpu: 0.0.40
codegen_flags: <defaults>
</compile_context>

<pallas_src>
import functools

import jax
import jax.numpy as jnp
from jax.experimental import pallas as pl
from jax.experimental.pallas import tpu as pltpu

_LEAK = 0.1  # LeakyReLU(negative_slope=0.1) — the module's default hidden activation


def _softplus(x):
    # numerically stable softplus built from Mosaic-supported elementwise ops
    return jnp.maximum(x, 0.0) + jnp.log1p(jnp.exp(-jnp.abs(x)))


def _actor_kernel(n_layers, x_ref, *refs):
    # refs layout: [w1, b1, ..., wn, bn, logstd, min_logstd, max_logstd, mu_out, std_out]
    wb_refs = refs[: 2 * n_layers]
    logstd_ref, min_ref, max_ref = refs[2 * n_layers: 2 * n_layers + 3]
    mu_ref, std_ref = refs[2 * n_layers + 3:]

    # ---- fused MLP (all weights resident in VMEM, f32 MXU accumulation) ----
    h = x_ref[...].astype(jnp.float32)
    for l in range(n_layers):
        w = wb_refs[2 * l][...]
        b = wb_refs[2 * l + 1][...].astype(jnp.float32)
        h = jnp.dot(h, w, preferred_element_type=jnp.float32) + b
        if l < n_layers - 1:
            h = jnp.maximum(h, _LEAK * h)          # LeakyReLU(0.1)
    mu_ref[...] = h.astype(mu_ref.dtype)

    # ---- std = exp(soft_clamp(logstd, min_logstd, max_logstd)), batch-shared ----
    ls = logstd_ref[...].astype(jnp.float32)
    mx = max_ref[...].astype(jnp.float32)
    mn = min_ref[...].astype(jnp.float32)
    ls = mx - _softplus(mx - ls)                   # soft_clamp upper bound
    ls = mn + _softplus(ls - mn)                   # soft_clamp lower bound
    std = jnp.exp(ls)                              # (1, A_pad)
    std_ref[...] = jnp.broadcast_to(std, std_ref.shape).astype(std_ref.dtype)


def continuous_actor_forward(state, layers, logstd, min_logstd, max_logstd,
                             *, block_b=256):
    """Forward pass of ContinuousActor (conditioned_std=False).

    state:  (B, state_dim)
    layers: list of (weight (in, out), bias (out,)) for each nn.Linear
    logstd, min_logstd, max_logstd: (action_dim,)
    returns (mu (B, action_dim), std (B, action_dim)) — DiagnalNormal parameters.
    """
    B, S = state.shape
    n_layers = len(layers)
    A = layers[-1][0].shape[1]
    dtype = state.dtype

    # ---- batch tiling: pad to sublane multiple; single grid step when small ----
    B_pad = max(8, -(-B // 8) * 8)
    if B_pad > block_b:
        B_pad = -(-B_pad // block_b) * block_b
        tb = block_b
    else:
        tb = B_pad
    x = state if B_pad == B else jnp.pad(state, ((0, B_pad - B), (0, 0)))

    # ---- lane-dense final width: pad last layer + dist params to multiple of 128 ----
    A_pad = -(-A // 128) * 128
    w_last, b_last = layers[-1]
    w_last = jnp.pad(w_last, ((0, 0), (0, A_pad - A)))
    b_last = jnp.pad(b_last.reshape(1, -1), ((0, 0), (0, A_pad - A)))
    logstd2 = jnp.pad(logstd.reshape(1, -1), ((0, 0), (0, A_pad - A)))
    min2 = jnp.pad(min_logstd.reshape(1, -1), ((0, 0), (0, A_pad - A)))
    max2 = jnp.pad(max_logstd.reshape(1, -1), ((0, 0), (0, A_pad - A)))

    flat_inputs = [x]
    in_specs = [pl.BlockSpec((tb, S), lambda i: (i, 0))]
    flops = 0
    for li, (w, b) in enumerate(layers):
        if li == n_layers - 1:
            w2, b2 = w_last, b_last
        else:
            w2, b2 = w, b.reshape(1, -1)
        flat_inputs += [w2, b2]
        in_specs += [
            pl.BlockSpec(w2.shape, lambda i: (0, 0)),   # full weight resident in VMEM
            pl.BlockSpec(b2.shape, lambda i: (0, 0)),
        ]
        flops += 2 * B_pad * w2.shape[0] * w2.shape[1]
    flat_inputs += [logstd2, min2, max2]
    in_specs += [pl.BlockSpec((1, A_pad), lambda i: (0, 0))] * 3

    bytes_accessed = sum(int(a.size) * a.dtype.itemsize for a in flat_inputs)
    bytes_accessed += 2 * B_pad * A_pad * jnp.dtype(dtype).itemsize

    out_shape = (jax.ShapeDtypeStruct((B_pad, A_pad), dtype),
                 jax.ShapeDtypeStruct((B_pad, A_pad), dtype))
    out_specs = (pl.BlockSpec((tb, A_pad), lambda i: (i, 0)),
                 pl.BlockSpec((tb, A_pad), lambda i: (i, 0)))

    grid = (B_pad // tb,)

    mu_pad, std_pad = pl.pallas_call(
        functools.partial(_actor_kernel, n_layers),
        out_shape=out_shape,
        grid_spec=pltpu.PrefetchScalarGridSpec(
            num_scalar_prefetch=0,
            grid=grid,
            in_specs=in_specs,
            out_specs=out_specs,
        ),
        compiler_params=pltpu.CompilerParams(
            dimension_semantics=("parallel",),   # batch tiles can split across v7x TCs
        ),
        cost_estimate=pl.CostEstimate(
            flops=flops,
            transcendentals=5 * A_pad * (B_pad // tb),
            bytes_accessed=bytes_accessed,
        ),
    )(*flat_inputs)

    return mu_pad[:B, :A], std_pad[:B, :A]


def init_continuous_actor_params(key, state_dim, action_dim, hidden_features=128,
                                 hidden_layers=2, dtype=jnp.float32):
    """Deterministic init mirroring nn.Linear U(-1/sqrt(fan_in), 1/sqrt(fan_in)) and
    DistributionWrapper('normal', conditioned_std=False) parameters."""
    dims = [state_dim] + [hidden_features] * hidden_layers + [action_dim]
    layers = []
    keys = jax.random.split(key, len(dims) - 1)
    for k, fi, fo in zip(keys, dims[:-1], dims[1:]):
        kw, kb = jax.random.split(k)
        bound = 1.0 / (fi ** 0.5)
        w = jax.random.uniform(kw, (fi, fo), dtype, -bound, bound)
        b = jax.random.uniform(kb, (fo,), dtype, -bound, bound)
        layers.append((w, b))
    logstd = jnp.zeros((action_dim,), dtype)
    max_logstd = jnp.zeros((action_dim,), dtype)
    min_logstd = jnp.full((action_dim,), -10.0, dtype)
    return layers, logstd, min_logstd, max_logstd


def _reference(state, layers, logstd, min_logstd, max_logstd):
    h = state
    for li, (w, b) in enumerate(layers):
        h = h @ w + b
        if li < len(layers) - 1:
            h = jnp.where(h > 0, h, _LEAK * h)
    mu = h
    ls = max_logstd - jax.nn.softplus(max_logstd - logstd)
    ls = min_logstd + jax.nn.softplus(ls - min_logstd)
    std = jnp.broadcast_to(jnp.exp(ls), mu.shape)
    return mu, std


# TODO(synk): conditioned_std=True branch (chunk MLP output into mu/logstd) is not
# implemented; ContinuousActor's default is conditioned_std=False.  Sampling from the
# DiagnalNormal is out of scope — the kernel returns the distribution parameters.

if __name__ == "__main__":
    key = jax.random.PRNGKey(0)
    k_params, k_state = jax.random.split(key)

    state_dim = 16
    action_dim = 8
    hidden_features = 128
    hidden_layers = 2
    batch = 8

    layers, logstd, min_logstd, max_logstd = init_continuous_actor_params(
        k_params, state_dim, action_dim, hidden_features, hidden_layers)

    state = jax.random.normal(k_state, (batch, state_dim), jnp.float32)

    mu, std = continuous_actor_forward(state, layers, logstd, min_logstd, max_logstd)
    mu = jax.block_until_ready(mu)
    std = jax.block_until_ready(std)

    mu_ref, std_ref = _reference(state, layers, logstd, min_logstd, max_logstd)

    assert mu.shape == (batch, action_dim)
    assert std.shape == (batch, action_dim)
    assert jnp.allclose(mu, mu_ref, atol=1e-4, rtol=1e-4)
    assert jnp.allclose(std, std_ref, atol=1e-5, rtol=1e-5)

    # Secondary check: exercise the multi-tile (grid > 1) path with batch padding.
    batch2 = 40
    state2 = jax.random.normal(jax.random.PRNGKey(1), (batch2, state_dim), jnp.float32)
    mu2, std2 = continuous_actor_forward(state2, layers, logstd, min_logstd, max_logstd,
                                         block_b=16)
    mu2 = jax.block_until_ready(mu2)
    std2 = jax.block_until_ready(std2)
    mu2_ref, std2_ref = _reference(state2, layers, logstd, min_logstd, max_logstd)
    assert mu2.shape == (batch2, action_dim)
    assert jnp.allclose(mu2, mu2_ref, atol=1e-4, rtol=1e-4)
    assert jnp.allclose(std2, std2_ref, atol=1e-5, rtol=1e-5)

    print("KERNEL_OK")
</pallas_src>

<mosaic_0001>
module attributes {stable_mosaic.version = 11 : i64} {
  func.func @_actor_kernel(%arg0: i32, %arg1: memref<8x16xf32, #tpu.memory_space<vmem>>, %arg2: memref<16x128xf32, #tpu.memory_space<vmem>>, %arg3: memref<1x128xf32, #tpu.memory_space<vmem>>, %arg4: memref<128x128xf32, #tpu.memory_space<vmem>>, %arg5: memref<1x128xf32, #tpu.memory_space<vmem>>, %arg6: memref<128x128xf32, #tpu.memory_space<vmem>>, %arg7: memref<1x128xf32, #tpu.memory_space<vmem>>, %arg8: memref<1x128xf32, #tpu.memory_space<vmem>>, %arg9: memref<1x128xf32, #tpu.memory_space<vmem>>, %arg10: memref<1x128xf32, #tpu.memory_space<vmem>>, %arg11: memref<8x128xf32, #tpu.memory_space<vmem>>, %arg12: memref<8x128xf32, #tpu.memory_space<vmem>>) attributes {dimension_semantics = [#tpu.dimension_semantics<parallel>], iteration_bounds = array<i64: 1>, scalar_prefetch = 0 : i64, scratch_operands = 0 : i64, tpu.core_type = #tpu.core_type<tc>, window_params = [{transform_indices = @transform_0, window_bounds = array<i64: 8, 16>}, {pipeline_mode = #tpu.pipeline_mode<synchronous>, transform_indices = @transform_1, window_bounds = array<i64: 16, 128>}, {pipeline_mode = #tpu.pipeline_mode<synchronous>, transform_indices = @transform_2, window_bounds = array<i64: 1, 128>}, {pipeline_mode = #tpu.pipeline_mode<synchronous>, transform_indices = @transform_3, window_bounds = array<i64: 128, 128>}, {pipeline_mode = #tpu.pipeline_mode<synchronous>, transform_indices = @transform_4, window_bounds = array<i64: 1, 128>}, {pipeline_mode = #tpu.pipeline_mode<synchronous>, transform_indices = @transform_5, window_bounds = array<i64: 128, 128>}, {pipeline_mode = #tpu.pipeline_mode<synchronous>, transform_indices = @transform_6, window_bounds = array<i64: 1, 128>}, {pipeline_mode = #tpu.pipeline_mode<synchronous>, transform_indices = @transform_7, window_bounds = array<i64: 1, 128>}, {pipeline_mode = #tpu.pipeline_mode<synchronous>, transform_indices = @transform_8, window_bounds = array<i64: 1, 128>}, {pipeline_mode = #tpu.pipeline_mode<synchronous>, transform_indices = @transform_9, window_bounds = array<i64: 1, 128>}, {transform_indices = @transform_10, window_bounds = array<i64: 8, 128>}, {transform_indices = @transform_11, window_bounds = array<i64: 8, 128>}]} {
    %c0 = arith.constant 0 : index
    %c0_0 = arith.constant 0 : index
    %0 = vector.load %arg1[%c0, %c0_0] : memref<8x16xf32, #tpu.memory_space<vmem>>, vector<8x16xf32>
    %c0_1 = arith.constant 0 : index
    %c0_2 = arith.constant 0 : index
    %1 = vector.load %arg2[%c0_1, %c0_2] : memref<16x128xf32, #tpu.memory_space<vmem>>, vector<16x128xf32>
    %c0_3 = arith.constant 0 : index
    %c0_4 = arith.constant 0 : index
    %2 = vector.load %arg3[%c0_3, %c0_4] : memref<1x128xf32, #tpu.memory_space<vmem>>, vector<1x128xf32>
    %cst = arith.constant dense<0.000000e+00> : vector<8x128xf32>
    %3 = tpu.matmul %0, %1, %cst {dimension_numbers = #tpu.dot_dimension_numbers<[1], [0], [0], [1], [0, 0, 1, 1], [], []>} : vector<8x16xf32>, vector<16x128xf32>, vector<8x128xf32> -> vector<8x128xf32>
    %4 = vector.broadcast %2 : vector<1x128xf32> to vector<8x128xf32>
    %5 = arith.addf %3, %4 : vector<8x128xf32>
    %cst_5 = arith.constant 1.000000e-01 : f32
    %6 = vector.broadcast %cst_5 : f32 to vector<8x128xf32>
    %7 = arith.mulf %6, %5 : vector<8x128xf32>
    %8 = arith.maximumf %5, %7 : vector<8x128xf32>
    %c0_6 = arith.constant 0 : index
    %c0_7 = arith.constant 0 : index
    %9 = vector.load %arg4[%c0_6, %c0_7] : memref<128x128xf32, #tpu.memory_space<vmem>>, vector<128x128xf32>
    %c0_8 = arith.constant 0 : index
    %c0_9 = arith.constant 0 : index
    %10 = vector.load %arg5[%c0_8, %c0_9] : memref<1x128xf32, #tpu.memory_space<vmem>>, vector<1x128xf32>
    %cst_10 = arith.constant dense<0.000000e+00> : vector<8x128xf32>
    %11 = tpu.matmul %8, %9, %cst_10 {dimension_numbers = #tpu.dot_dimension_numbers<[1], [0], [0], [1], [0, 0, 1, 1], [], []>} : vector<8x128xf32>, vector<128x128xf32>, vector<8x128xf32> -> vector<8x128xf32>
    %12 = vector.broadcast %10 : vector<1x128xf32> to vector<8x128xf32>
    %13 = arith.addf %11, %12 : vector<8x128xf32>
    %cst_11 = arith.constant 1.000000e-01 : f32
    %14 = vector.broadcast %cst_11 : f32 to vector<8x128xf32>
    %15 = arith.mulf %14, %13 : vector<8x128xf32>
    %16 = arith.maximumf %13, %15 : vector<8x128xf32>
    %c0_12 = arith.constant 0 : index
    %c0_13 = arith.constant 0 : index
    %17 = vector.load %arg6[%c0_12, %c0_13] : memref<128x128xf32, #tpu.memory_space<vmem>>, vector<128x128xf32>
    %c0_14 = arith.constant 0 : index
    %c0_15 = arith.constant 0 : index
    %18 = vector.load %arg7[%c0_14, %c0_15] : memref<1x128xf32, #tpu.memory_space<vmem>>, vector<1x128xf32>
    %cst_16 = arith.constant dense<0.000000e+00> : vector<8x128xf32>
    %19 = tpu.matmul %16, %17, %cst_16 {dimension_numbers = #tpu.dot_dimension_numbers<[1], [0], [0], [1], [0, 0, 1, 1], [], []>} : vector<8x128xf32>, vector<128x128xf32>, vector<8x128xf32> -> vector<8x128xf32>
    %20 = vector.broadcast %18 : vector<1x128xf32> to vector<8x128xf32>
    %21 = arith.addf %19, %20 : vector<8x128xf32>
    %c0_17 = arith.constant 0 : index
    %c0_18 = arith.constant 0 : index
    %22 = vector.load %arg11[%c0_17, %c0_18] : memref<8x128xf32, #tpu.memory_space<vmem>>, vector<8x128xf32>
    tpu.vector_store %arg11[%c0_17, %c0_18], %21 {strides = array<i32>} : memref<8x128xf32, #tpu.memory_space<vmem>>, vector<8x128xf32>,
    %c0_19 = arith.constant 0 : index
    %c0_20 = arith.constant 0 : index
    %23 = vector.load %arg8[%c0_19, %c0_20] : memref<1x128xf32, #tpu.memory_space<vmem>>, vector<1x128xf32>
    %c0_21 = arith.constant 0 : index
    %c0_22 = arith.constant 0 : index
    %24 = vector.load %arg10[%c0_21, %c0_22] : memref<1x128xf32, #tpu.memory_space<vmem>>, vector<1x128xf32>
    %c0_23 = arith.constant 0 : index
    %c0_24 = arith.constant 0 : index
    %25 = vector.load %arg9[%c0_23, %c0_24] : memref<1x128xf32, #tpu.memory_space<vmem>>, vector<1x128xf32>
    %26 = arith.subf %24, %23 : vector<1x128xf32>
    %cst_25 = arith.constant 0.000000e+00 : f32
    %27 = vector.broadcast %cst_25 : f32 to vector<1x128xf32>
    %28 = arith.maximumf %26, %27 : vector<1x128xf32>
    %29 = math.absf %26 : vector<1x128xf32>
    %cst_26 = arith.constant 0.000000e+00 : f32
    %30 = vector.broadcast %cst_26 : f32 to vector<1x128xf32>
    %31 = arith.subf %30, %29 : vector<1x128xf32>
    %32 = math.exp %31 : vector<1x128xf32>
    %33 = math.log1p %32 : vector<1x128xf32>
    %34 = arith.addf %28, %33 : vector<1x128xf32>
    %35 = arith.subf %24, %34 : vector<1x128xf32>
    %36 = arith.subf %35, %25 : vector<1x128xf32>
    %cst_27 = arith.constant 0.000000e+00 : f32
    %37 = vector.broadcast %cst_27 : f32 to vector<1x128xf32>
    %38 = arith.maximumf %36, %37 : vector<1x128xf32>
    %39 = math.absf %36 : vector<1x128xf32>
    %cst_28 = arith.constant 0.000000e+00 : f32
    %40 = vector.broadcast %cst_28 : f32 to vector<1x128xf32>
    %41 = arith.subf %40, %39 : vector<1x128xf32>
    %42 = math.exp %41 : vector<1x128xf32>
    %43 = math.log1p %42 : vector<1x128xf32>
    %44 = arith.addf %38, %43 : vector<1x128xf32>
    %45 = arith.addf %25, %44 : vector<1x128xf32>
    %46 = math.exp %45 : vector<1x128xf32>
    %47 = vector.shape_cast %46 : vector<1x128xf32> to vector<1x128xf32>
    %48 = vector.broadcast %47 : vector<1x128xf32> to vector<8x128xf32>
    %c0_29 = arith.constant 0 : index
    %c0_30 = arith.constant 0 : index
    %49 = vector.load %arg12[%c0_29, %c0_30] : memref<8x128xf32, #tpu.memory_space<vmem>>, vector<8x128xf32>
    tpu.vector_store %arg12[%c0_29, %c0_30], %48 {strides = array<i32>} : memref<8x128xf32, #tpu.memory_space<vmem>>, vector<8x128xf32>,
    return
  }
  func.func @transform_0(%arg0: i32) -> (i32, i32) {
    %c0_i32 = arith.constant 0 : i32
    %c0_i32_0 = arith.constant 0 : i32
    return %arg0, %c0_i32 : i32, i32
  }
  func.func @transform_1(%arg0: i32) -> (i32, i32) {
    %c0_i32 = arith.constant 0 : i32
    %c0_i32_0 = arith.constant 0 : i32
    %c0_i32_1 = arith.constant 0 : i32
    return %c0_i32, %c0_i32_0 : i32, i32
  }
  func.func @transform_2(%arg0: i32) -> (i32, i32) {
    %c0_i32 = arith.constant 0 : i32
    %c0_i32_0 = arith.constant 0 : i32
    %c0_i32_1 = arith.constant 0 : i32
    return %c0_i32, %c0_i32_0 : i32, i32
  }
  func.func @transform_3(%arg0: i32) -> (i32, i32) {
    %c0_i32 = arith.constant 0 : i32
    %c0_i32_0 = arith.constant 0 : i32
    %c0_i32_1 = arith.constant 0 : i32
    return %c0_i32, %c0_i32_0 : i32, i32
  }
  func.func @transform_4(%arg0: i32) -> (i32, i32) {
    %c0_i32 = arith.constant 0 : i32
    %c0_i32_0 = arith.constant 0 : i32
    %c0_i32_1 = arith.constant 0 : i32
    return %c0_i32, %c0_i32_0 : i32, i32
  }
  func.func @transform_5(%arg0: i32) -> (i32, i32) {
    %c0_i32 = arith.constant 0 : i32
    %c0_i32_0 = arith.constant 0 : i32
    %c0_i32_1 = arith.constant 0 : i32
    return %c0_i32, %c0_i32_0 : i32, i32
  }
  func.func @transform_6(%arg0: i32) -> (i32, i32) {
    %c0_i32 = arith.constant 0 : i32
    %c0_i32_0 = arith.constant 0 : i32
    %c0_i32_1 = arith.constant 0 : i32
    return %c0_i32, %c0_i32_0 : i32, i32
  }
  func.func @transform_7(%arg0: i32) -> (i32, i32) {
    %c0_i32 = arith.constant 0 : i32
    %c0_i32_0 = arith.constant 0 : i32
    %c0_i32_1 = arith.constant 0 : i32
    return %c0_i32, %c0_i32_0 : i32, i32
  }
  func.func @transform_8(%arg0: i32) -> (i32, i32) {
    %c0_i32 = arith.constant 0 : i32
    %c0_i32_0 = arith.constant 0 : i32
    %c0_i32_1 = arith.constant 0 : i32
    return %c0_i32, %c0_i32_0 : i32, i32
  }
  func.func @transform_9(%arg0: i32) -> (i32, i32) {
    %c0_i32 = arith.constant 0 : i32
    %c0_i32_0 = arith.constant 0 : i32
    %c0_i32_1 = arith.constant 0 : i32
    return %c0_i32, %c0_i32_0 : i32, i32
  }
  func.func @transform_10(%arg0: i32) -> (i32, i32) {
    %c0_i32 = arith.constant 0 : i32
    %c0_i32_0 = arith.constant 0 : i32
    return %arg0, %c0_i32 : i32, i32
  }
  func.func @transform_11(%arg0: i32) -> (i32, i32) {
    %c0_i32 = arith.constant 0 : i32
    %c0_i32_0 = arith.constant 0 : i32
    return %arg0, %c0_i32 : i32, i32
  }
}

</mosaic_0001>

<llo_original>
// kernel: tpu_custom_call.1
$region0: #{tpu_custom_call.1}
  #allocation0 [shape = 'u32[]', space=smem, size = 0x4, offset = 0x4, fixed_abs, tag = 'smem constant byte address 0x4 - core index']
  #allocation1 [shape = 'u32[72,128]{1,0:T(1,128)}', space=vmem, size = 0x9000, scoped, tag = 'internal scratch']
  %s0 = inlined_call_operand.hbm [shape: f32[8,16], index: 0, kind: input, shape index: {}]
  %s1 = inlined_call_operand.hbm [shape: f32[16,128], index: 1, kind: input, shape index: {}]
  %s2 = inlined_call_operand.vmem [shape: f32[1,128], index: 2, kind: input, shape index: {}]
  %s3 = inlined_call_operand.hbm [shape: f32[128,128], index: 3, kind: input, shape index: {}]
  %s4 = inlined_call_operand.vmem [shape: f32[1,128], index: 4, kind: input, shape index: {}]
  %s5 = inlined_call_operand.hbm [shape: f32[128,128], index: 5, kind: input, shape index: {}]
  %s6 = inlined_call_operand.vmem [shape: f32[1,128], index: 6, kind: input, shape index: {}]
  %s7 = inlined_call_operand.vmem [shape: f32[1,128], index: 7, kind: input, shape index: {}]
  %s8 = inlined_call_operand.vmem [shape: f32[1,128], index: 8, kind: input, shape index: {}]
  %s9 = inlined_call_operand.vmem [shape: f32[1,128], index: 9, kind: input, shape index: {}]
  %s10 = inlined_call_operand.hbm [shape: f32[8,128], index: 10, kind: output, shape index: {0}]
  %s11 = inlined_call_operand.hbm [shape: f32[8,128], index: 11, kind: output, shape index: {1}]
  %12 = xla_tuple %s10, %s11
  %s13 = sld [smem:[#allocation0]]
  $region74: #{tpu_custom_call.1} parent=0
    _
  %s15 = ssub.s32 1, %s13
  %s16 = scalar_select 0, %s15, %s13
  $region1: #{tpu_custom_call.1} parent=0
    #allocation2 [shape = 'u8[4096]{0}', space=vmem, size = 0x1000, scoped, tag = 'input window, operand 0, single buffered']
    #allocation3 [shape = 's32[1]{0}', space=sflag, size = 0x4, scoped, tag = 'scoped memory for tpu_custom_call.1']
    #allocation4 [shape = 's32[1]{0}', space=sflag, size = 0x4, scoped, tag = 'scoped memory for tpu_custom_call.1']
    #allocation5 [shape = 'u8[8192]{0}', space=vmem, size = 0x2000, scoped, tag = 'input window, operand 1, single buffered']
    #allocation6 [shape = 's32[1]{0}', space=sflag, size = 0x4, scoped, tag = 'scoped memory for tpu_custom_call.1']
    #allocation7 [shape = 'u8[65536]{0}', space=vmem, size = 0x10000, scoped, tag = 'input window, operand 3, single buffered']
    #allocation8 [shape = 'u8[65536]{0}', space=vmem, size = 0x10000, scoped, tag = 'input window, operand 5, single buffered']
    #allocation9 [shape = 's32[1]{0}', space=sflag, size = 0x4, scoped, tag = 'scoped memory for tpu_custom_call.1']
    #allocation10 [shape = 'u8[4096]{0}', space=vmem, size = 0x1000, scoped, tag = 'output window, operand 0, single buffered']
    #allocation11 [shape = 'u8[4096]{0}', space=vmem, size = 0x1000, scoped, tag = 'output window, operand 1, single buffered']
    #allocation12 [shape = 's32[1]{0}', space=sflag, size = 0x4, scoped, tag = 'scoped memory for tpu_custom_call.1']
    %17 = vsyncpa [#allocation3], 0
    %18 = vsyncpa [#allocation6], 0
    %19 = vsyncpa [#allocation9], 0
    %20 = vsyncpa [#allocation4], 0
    %21 = vsyncpa [#allocation12], 0
    // Predicated region
    $region2: #{tpu_custom_call.1} parent=1 // pred_check
      _
    $region3: #{tpu_custom_call.1} parent=1 // pred_check_branch
      %23 = sbr.rel (0) target = $region5
    $region4: #{tpu_custom_call.1} parent=1 // pred_region
      %25 = vsyncadd [#allocation3], 0
      %s27 = sshll.u32 %s0, 4
      %s28 = int_to_ptr.hbm [resolvable:$true] %s27
      %s29 = sshll.u32 [#allocation2], 4
      %s30 = int_to_ptr.vmem [resolvable:$true] %s29
      %32 = dma.hbm_to_vmem [thread:$0]  %s28, 128, %s30, [#allocation3]
    $region5: #{tpu_custom_call.1} parent=1 // pred_fallthru
      _
    // Predicated region
    $region6: #{tpu_custom_call.1} parent=1 // pred_check
      _
    $region7: #{tpu_custom_call.1} parent=1 // pred_check_branch
      %34 = sbr.rel (0) target = $region9
    $region8: #{tpu_custom_call.1} parent=1 // pred_region
      %36 = vsyncadd [#allocation6], 0
      %s37 = sshll.u32 %s1, 4
      %s38 = int_to_ptr.hbm [resolvable:$true] %s37
      %s39 = sshll.u32 [#allocation5], 4
      %s40 = int_to_ptr.vmem [resolvable:$true] %s39
      %45 = dma.hbm_to_vmem [thread:$0]  %s38, 256, %s40, [#allocation6], 128, 128, 8
    $region9: #{tpu_custom_call.1} parent=1 // pred_fallthru
      _
    // Predicated region
    $region10: #{tpu_custom_call.1} parent=1 // pred_check
      _
    $region11: #{tpu_custom_call.1} parent=1 // pred_check_branch
      %47 = sbr.rel (0) target = $region13
    $region12: #{tpu_custom_call.1} parent=1 // pred_region
      _
    $region13: #{tpu_custom_call.1} parent=1 // pred_fallthru
      _
    // Predicated region
    $region14: #{tpu_custom_call.1} parent=1 // pred_check
      _
    $region15: #{tpu_custom_call.1} parent=1 // pred_check_branch
      %49 = sbr.rel (0) target = $region17
    $region16: #{tpu_custom_call.1} parent=1 // pred_region
      %51 = vsyncadd [#allocation6], 0
      %s52 = sshll.u32 %s3, 4
      %s53 = int_to_ptr.hbm [resolvable:$true] %s52
      %s54 = sshll.u32 [#allocation7], 4
      %s55 = int_to_ptr.vmem [resolvable:$true] %s54
      %60 = dma.hbm_to_vmem [thread:$0]  %s53, 2048, %s55, [#allocation6], 128, 128, 8
    $region17: #{tpu_custom_call.1} parent=1 // pred_fallthru
      _
    // Predicated region
    $region18: #{tpu_custom_call.1} parent=1 // pred_check
      _
    $region19: #{tpu_custom_call.1} parent=1 // pred_check_branch
      %62 = sbr.rel (0) target = $region21
    $region20: #{tpu_custom_call.1} parent=1 // pred_region
      _
    $region21: #{tpu_custom_call.1} parent=1 // pred_fallthru
      _
    // Predicated region
    $region22: #{tpu_custom_call.1} parent=1 // pred_check
      _
    $region23: #{tpu_custom_call.1} parent=1 // pred_check_branch
      %64 = sbr.rel (0) target = $region25
    $region24: #{tpu_custom_call.1} parent=1 // pred_region
      %66 = vsyncadd [#allocation9], 0
      %s67 = sshll.u32 %s5, 4
      %s68 = int_to_ptr.hbm [resolvable:$true] %s67
      %s69 = sshll.u32 [#allocation8], 4
      %s70 = int_to_ptr.vmem [resolvable:$true] %s69
      %75 = dma.hbm_to_vmem [thread:$0]  %s68, 2048, %s70, [#allocation9], 128, 128, 8
    $region25: #{tpu_custom_call.1} parent=1 // pred_fallthru
      _
    // Predicated region
    $region26: #{tpu_custom_call.1} parent=1 // pred_check
      _
    $region27: #{tpu_custom_call.1} parent=1 // pred_check_branch
      %77 = sbr.rel (0) target = $region29
    $region28: #{tpu_custom_call.1} parent=1 // pred_region
      _
    $region29: #{tpu_custom_call.1} parent=1 // pred_fallthru
      _
    // Predicated region
    $region30: #{tpu_custom_call.1} parent=1 // pred_check
      _
    $region31: #{tpu_custom_call.1} parent=1 // pred_check_branch
      %79 = sbr.rel (0) target = $region33
    $region32: #{tpu_custom_call.1} parent=1 // pred_region
      _
    $region33: #{tpu_custom_call.1} parent=1 // pred_fallthru
      _
    // Predicated region
    $region34: #{tpu_custom_call.1} parent=1 // pred_check
      _
    $region35: #{tpu_custom_call.1} parent=1 // pred_check_branch
      %81 = sbr.rel (0) target = $region37
    $region36: #{tpu_custom_call.1} parent=1 // pred_region
      _
    $region37: #{tpu_custom_call.1} parent=1 // pred_fallthru
      _
    // Predicated region
    $region38: #{tpu_custom_call.1} parent=1 // pred_check
      _
    $region39: #{tpu_custom_call.1} parent=1 // pred_check_branch
      %83 = sbr.rel (0) target = $region41
    $region40: #{tpu_custom_call.1} parent=1 // pred_region
      _
    $region41: #{tpu_custom_call.1} parent=1 // pred_fallthru
      _
    // Predicated region
    $region42: #{tpu_custom_call.1} parent=1 // pred_check
      _
    $region43: #{tpu_custom_call.1} parent=1 // pred_check_branch
      %85 = sbr.rel (0) target = $region45
    $region44: #{tpu_custom_call.1} parent=1 // pred_region
      %87 = dma.done [#allocation3], 128
    $region45: #{tpu_custom_call.1} parent=1 // pred_fallthru
      _
    // Predicated region
    $region46: #{tpu_custom_call.1} parent=1 // pred_check
      _
    $region47: #{tpu_custom_call.1} parent=1 // pred_check_branch
      %89 = sbr.rel (0) target = $region49
    $region48: #{tpu_custom_call.1} parent=1 // pred_region
      %91 = dma.done [#allocation6], 256
    $region49: #{tpu_custom_call.1} parent=1 // pred_fallthru
      _
    // Predicated region
    $region50: #{tpu_custom_call.1} parent=1 // pred_check
      _
    $region51: #{tpu_custom_call.1} parent=1 // pred_check_branch
      %93 = sbr.rel (0) target = $region53
    $region52: #{tpu_custom_call.1} parent=1 // pred_region
      %95 = dma.done [#allocation6], 2048
    $region53: #{tpu_custom_call.1} parent=1 // pred_fallthru
      _
    // Predicated region
    $region54: #{tpu_custom_call.1} parent=1 // pred_check
      _
    $region55: #{tpu_custom_call.1} parent=1 // pred_check_branch
      %97 = sbr.rel (0) target = $region57
    $region56: #{tpu_custom_call.1} parent=1 // pred_region
      %99 = dma.done [#allocation9], 2048
    $region57: #{tpu_custom_call.1} parent=1 // pred_fallthru
      _
    %v100 = vld [vmem:[#allocation2] sm:$0xff]
    %v101 = vld [vmem:[#allocation5] sm:$0xff]
    %v102 = vld [vmem:[#allocation5 + $0x8] sm:$0xff]
    %v103 = vld [vmem:[%s2] sm:$0x1]
    %v105 = vperm.slane %v103, 0
    %vm107 = vcmask 130048
    %v109 = vsel %vm107, %v100, 0
    %111 = vmatpush.msra.mxu0 0.0
    %112 = vmatpush.msra.mxu0 0.0
    %113 = vmatpush.msra.mxu0 0.0
    %114 = vmatpush.msra.mxu0 0.0
    %115 = vmatpush.msra.mxu0 0.0
    %116 = vmatpush.msra.mxu0 0.0
    %117 = vmatpush.msra.mxu0 0.0
    %118 = vmatpush.msra.mxu0 0.0
    %119 = vmatpush.msra.mxu0 0.0
    %120 = vmatpush.msra.mxu0 0.0
    %121 = vmatpush.msra.mxu0 0.0
    %122 = vmatpush.msra.mxu0 0.0
    %123 = vmatpush.msra.mxu0 0.0
    %124 = vmatpush.msra.mxu0 0.0
    %125 = vmatpush.msra.mxu0 %v102
    %126 = vmatpush.msra.mxu0 %v101
    %127 = vmatmul.f32.gmra.mxu0 %v109
    %v128 = vpop.f32.mrf.mxu0
    %v129 = vadd.f32 %v105, %v128
    %130 = vdwg.mxu0
    %v131 = vmul.f32 %v129, 0.1
    %v132 = vmax.f32 %v129, %v131
    %v133 = vld [vmem:[#allocation7] sm:$0xff]
    %v134 = vld [vmem:[#allocation7 + $0x8] sm:$0xff]
    %v135 = vld [vmem:[#allocation7 + $0x10] sm:$0xff]
    %v136 = vld [vmem:[#allocation7 + $0x18] sm:$0xff]
    %v137 = vld [vmem:[#allocation7 + $0x20] sm:$0xff]
    %v138 = vld [vmem:[#allocation7 + $0x28] sm:$0xff]
    %v139 = vld [vmem:[#allocation7 + $0x30] sm:$0xff]
    %v140 = vld [vmem:[#allocation7 + $0x38] sm:$0xff]
    %v141 = vld [vmem:[#allocation7 + $0x40] sm:$0xff]
    %v142 = vld [vmem:[#allocation7 + $0x48] sm:$0xff]
    %v143 = vld [vmem:[#allocation7 + $0x50] sm:$0xff]
    %v144 = vld [vmem:[#allocation7 + $0x58] sm:$0xff]
    %v145 = vld [vmem:[#allocation7 + $0x60] sm:$0xff]
    %v146 = vld [vmem:[#allocation7 + $0x68] sm:$0xff]
    %v147 = vld [vmem:[#allocation7 + $0x70] sm:$0xff]
    %v148 = vld [vmem:[#allocation7 + $0x78] sm:$0xff]
    %v149 = vld [vmem:[%s4] sm:$0x1]
    %v151 = vperm.slane %v149, 0
    %153 = vmatpush.msra.mxu0 %v148
    %154 = vmatpush.msra.mxu0 %v147
    %155 = vmatpush.msra.mxu0 %v146
    %156 = vmatpush.msra.mxu0 %v145
    %157 = vmatpush.msra.mxu0 %v144
    %158 = vmatpush.msra.mxu0 %v143
    %159 = vmatpush.msra.mxu0 %v142
    %160 = vmatpush.msra.mxu0 %v141
    %161 = vmatpush.msra.mxu0 %v140
    %162 = vmatpush.msra.mxu0 %v139
    %163 = vmatpush.msra.mxu0 %v138
    %164 = vmatpush.msra.mxu0 %v137
    %165 = vmatpush.msra.mxu0 %v136
    %166 = vmatpush.msra.mxu0 %v135
    %167 = vmatpush.msra.mxu0 %v134
    %168 = vmatpush.msra.mxu0 %v133
    %169 = vmatmul.f32.gmra.mxu0 %v132
    %v170 = vpop.f32.mrf.mxu0
    %v171 = vadd.f32 %v151, %v170
    %172 = vdwg.mxu0
    %v173 = vmul.f32 %v171, 0.1
    %v174 = vmax.f32 %v171, %v173
    %v175 = vld [vmem:[#allocation8] sm:$0xff]
    %v176 = vld [vmem:[#allocation8 + $0x8] sm:$0xff]
    %v177 = vld [vmem:[#allocation8 + $0x10] sm:$0xff]
    %v178 = vld [vmem:[#allocation8 + $0x18] sm:$0xff]
    %v179 = vld [vmem:[#allocation8 + $0x20] sm:$0xff]
    %v180 = vld [vmem:[#allocation8 + $0x28] sm:$0xff]
    %v181 = vld [vmem:[#allocation8 + $0x30] sm:$0xff]
    %v182 = vld [vmem:[#allocation8 + $0x38] sm:$0xff]
    %v183 = vld [vmem:[#allocation8 + $0x40] sm:$0xff]
    %v184 = vld [vmem:[#allocation8 + $0x48] sm:$0xff]
    %v185 = vld [vmem:[#allocation8 + $0x50] sm:$0xff]
    %v186 = vld [vmem:[#allocation8 + $0x58] sm:$0xff]
    %v187 = vld [vmem:[#allocation8 + $0x60] sm:$0xff]
    %v188 = vld [vmem:[#allocation8 + $0x68] sm:$0xff]
    %v189 = vld [vmem:[#allocation8 + $0x70] sm:$0xff]
    %v190 = vld [vmem:[#allocation8 + $0x78] sm:$0xff]
    %v191 = vld [vmem:[%s6] sm:$0x1]
    %v193 = vperm.slane %v191, 0
    %195 = vmatpush.msra.mxu0 %v190
    %196 = vmatpush.msra.mxu0 %v189
    %197 = vmatpush.msra.mxu0 %v188
    %198 = vmatpush.msra.mxu0 %v187
    %199 = vmatpush.msra.mxu0 %v186
    %200 = vmatpush.msra.mxu0 %v185
    %201 = vmatpush.msra.mxu0 %v184
    %202 = vmatpush.msra.mxu0 %v183
    %203 = vmatpush.msra.mxu0 %v182
    %204 = vmatpush.msra.mxu0 %v181
    %205 = vmatpush.msra.mxu0 %v180
    %206 = vmatpush.msra.mxu0 %v179
    %207 = vmatpush.msra.mxu0 %v178
    %208 = vmatpush.msra.mxu0 %v177
    %209 = vmatpush.msra.mxu0 %v176
    %210 = vmatpush.msra.mxu0 %v175
    %211 = vmatmul.f32.gmra.mxu0 %v174
    %v212 = vpop.f32.mrf.mxu0
    %v213 = vadd.f32 %v193, %v212
    %214 = vdwg.mxu0
    %215 = vst [vmem:[#allocation10] sm:$0xff] %v213
    %v216 = vld [vmem:[%s7] sm:$0x1]
    %v217 = vld [vmem:[%s9] sm:$0x1]
    %v218 = vld [vmem:[%s8] sm:$0x1]
    %v219 = vsub.f32 %v217, %v216
    %v220 = vmax.f32 %v219, 0.0
    %v221 = vand.u32 2147483647, %v219
    %v222 = vsub.f32 0.0, %v221
    %v223 = vmul.f32 %v222, 1.442695
    %v224 = vpow.pop %v223
    %v225 = vadd.f32 %v224, 1.0
    %v226 = vlog2.pop %v225
    %v227 = vmul.f32 %v226, 0.6931472
    %v228 = vmul.f32 -0.5, %v224
    %v229 = vadd.f32 %v228, 1.0
    %v230 = vmul.f32 %v229, %v224
    %v231 = vand.u32 2147483647, %v224
    %vm232 = vcmp.lt.f32.partialorder %v231, 0.0004427343
    %v233 = vsel %vm232, %v230, %v227
    %v234 = vadd.f32 %v220, %v233
    %v235 = vsub.f32 %v217, %v234
    %v236 = vsub.f32 %v235, %v218
    %v237 = vmax.f32 %v236, 0.0
    %v238 = vand.u32 2147483647, %v236
    %v239 = vsub.f32 0.0, %v238
    %v240 = vmul.f32 %v239, 1.442695
    %v241 = vpow.pop %v240
    %v242 = vadd.f32 %v241, 1.0
    %v243 = vlog2.pop %v242
    %v244 = vmul.f32 %v243, 0.6931472
    %v245 = vmul.f32 -0.5, %v241
    %v246 = vadd.f32 %v245, 1.0
    %v247 = vmul.f32 %v246, %v241
    %v248 = vand.u32 2147483647, %v241
    %vm249 = vcmp.lt.f32.partialorder %v248, 0.0004427343
    %v250 = vsel %vm249, %v247, %v244
    %v251 = vadd.f32 %v237, %v250
    %v252 = vadd.f32 %v218, %v251
    %v253 = vmul.f32 %v252, 1.442695
    %v254 = vpow.pop %v253
    %v256 = vperm.slane %v254, 0
    %258 = vst [vmem:[#allocation11] sm:$0xff] %v256
    // Predicated region
    $region58: #{tpu_custom_call.1} parent=1 // pred_check
      _
    $region59: #{tpu_custom_call.1} parent=1 // pred_check_branch
      %260 = sbr.rel (0) target = $region61
    $region60: #{tpu_custom_call.1} parent=1 // pred_region
      %262 = vsyncadd [#allocation4], 0
      %s264 = sshll.u32 [#allocation10], 4
      %s265 = int_to_ptr.vmem [resolvable:$true] %s264
      %s266 = sshll.u32 %s10, 4
      %s267 = int_to_ptr.hbm [resolvable:$true] %s266
      %269 = dma.vmem_to_hbm [thread:$0]  %s265, 128, %s267, [#allocation4]
    $region61: #{tpu_custom_call.1} parent=1 // pred_fallthru
      _
    // Predicated region
    $region62: #{tpu_custom_call.1} parent=1 // pred_check
      _
    $region63: #{tpu_custom_call.1} parent=1 // pred_check_branch
      %271 = sbr.rel (0) target = $region65
    $region64: #{tpu_custom_call.1} parent=1 // pred_region
      %273 = vsyncadd [#allocation12], 0
      %s275 = sshll.u32 [#allocation11], 4
      %s276 = int_to_ptr.vmem [resolvable:$true] %s275
      %s277 = sshll.u32 %s11, 4
      %s278 = int_to_ptr.hbm [resolvable:$true] %s277
      %280 = dma.vmem_to_hbm [thread:$0]  %s276, 128, %s278, [#allocation12]
    $region65: #{tpu_custom_call.1} parent=1 // pred_fallthru
      _
    // Predicated region
    $region66: #{tpu_custom_call.1} parent=1 // pred_check
      _
    $region67: #{tpu_custom_call.1} parent=1 // pred_check_branch
      %282 = sbr.rel (0) target = $region69
    $region68: #{tpu_custom_call.1} parent=1 // pred_region
      %284 = dma.done [#allocation4], 128
    $region69: #{tpu_custom_call.1} parent=1 // pred_fallthru
      _
    // Predicated region
    $region70: #{tpu_custom_call.1} parent=1 // pred_check
      _
    $region71: #{tpu_custom_call.1} parent=1 // pred_check_branch
      %286 = sbr.rel (0) target = $region73
    $region72: #{tpu_custom_call.1} parent=1 // pred_region
      %288 = dma.done [#allocation12], 128
    $region73: #{tpu_custom_call.1} parent=1 // pred_fallthru
      _
    %289 = vsyncpa [#allocation3], 1
    %290 = vsyncpa [#allocation6], 1
    %291 = vsyncpa [#allocation9], 1
    %292 = vsyncpa [#allocation4], 1
    %293 = vsyncpa [#allocation12], 1

</llo_original>
